<compile_context>
chip_gen: v7x
topology: tpu7x:2x2x1
jax: 0.10.0
libtpu: 0.0.40
codegen_flags: <defaults>
</compile_context>

<pallas_src>
import jax
import jax.numpy as jnp
from jax.experimental import pallas as pl
from jax.experimental.pallas import tpu as pltpu


def mlp_kernel(x_ref, w1_ref, b1_ref, w2_ref, b2_ref, w3_ref, b3_ref,
               w4_ref, b4_ref, o_ref):
    """One (TILE_B, n_input) activation tile through all four layers."""
    mm_dtype = w1_ref.dtype  # f32, or bf16 if bf16 weights were passed
    x = x_ref[...].astype(mm_dtype)

    # Layer 1: Linear -> sigmoid (accumulate in f32 on the MXU)
    h = jnp.dot(x, w1_ref[...], preferred_element_type=jnp.float32)
    h = jax.nn.sigmoid(h + b1_ref[...].astype(jnp.float32))
    # Layer 2: Linear -> sigmoid
    h = jnp.dot(h.astype(mm_dtype), w2_ref[...], preferred_element_type=jnp.float32)
    h = jax.nn.sigmoid(h + b2_ref[...].astype(jnp.float32))
    # Layer 3: Linear -> relu
    h = jnp.dot(h.astype(mm_dtype), w3_ref[...], preferred_element_type=jnp.float32)
    h = jnp.maximum(h + b3_ref[...].astype(jnp.float32), 0.0)
    # Output layer: Linear
    h = jnp.dot(h.astype(mm_dtype), w4_ref[...], preferred_element_type=jnp.float32)
    h = h + b4_ref[...].astype(jnp.float32)

    o_ref[...] = h.astype(o_ref.dtype)


def net_forward(x, params, *, tile_b=128):
    """Fused MLP forward pass: single pallas_call, batch-tiled grid.

    x: (B, n_input) float32
    params: dict with w1..w4 of shape (in, out) and b1..b4 of shape (1, out).
            Weights may be f32 or bf16; math accumulates in f32 either way.
    """
    w1, b1 = params["w1"], params["b1"]
    w2, b2 = params["w2"], params["b2"]
    w3, b3 = params["w3"], params["b3"]
    w4, b4 = params["w4"], params["b4"]

    B, n_input = x.shape
    n_out = w4.shape[1]

    # Batch tile: multiple of 8 (f32 sublane) amortizes the ~0.35us/step cost;
    # clamp to B for tiny batches (full-dim block is always legal).
    tile_b = min(tile_b, B)
    grid = (pl.cdiv(B, tile_b),)

    # Weights/biases: constant block index -> fetched once, stay VMEM-resident
    # across all batch tiles (no redundant HBM traffic).
    def resident(a):
        return pl.BlockSpec(a.shape, lambda i: (0, 0))

    # Right-size scoped VMEM: resident params + double-buffered activation
    # tiles + a few MiB headroom for compiler scratch (well under the 32 MiB
    # default and far under v7x's 64 MiB physical VMEM).
    def nbytes(a):
        return a.size * a.dtype.itemsize
    param_bytes = sum(nbytes(v) for v in params.values())
    act_bytes = 2 * tile_b * (n_input + n_out) * x.dtype.itemsize  # 2x = double-buffer
    vmem_limit = min(param_bytes + act_bytes + (4 << 20), 32 << 20)

    return pl.pallas_call(
        mlp_kernel,
        out_shape=jax.ShapeDtypeStruct((B, n_out), x.dtype),
        grid=grid,
        in_specs=[
            pl.BlockSpec((tile_b, n_input), lambda i: (i, 0)),  # streamed activations
            resident(w1), resident(b1),
            resident(w2), resident(b2),
            resident(w3), resident(b3),
            resident(w4), resident(b4),
        ],
        out_specs=pl.BlockSpec((tile_b, n_out), lambda i: (i, 0)),
        compiler_params=pltpu.CompilerParams(
            # independent batch tiles -> v7x shards them across both TensorCores;
            # neutral on v5e/v6e (single TC).
            dimension_semantics=("parallel",),
            vmem_limit_bytes=vmem_limit,
        ),
    )(x, w1, b1, w2, b2, w3, b3, w4, b4)


def init_params(key, n_input, n_h1, n_h2, n_h3, n_output):
    """Deterministic init mimicking nn.Linear's U(-1/sqrt(fan_in), 1/sqrt(fan_in))."""
    dims = [(n_input, n_h1), (n_h1, n_h2), (n_h2, n_h3), (n_h3, n_output)]
    params = {}
    for idx, (fan_in, fan_out) in enumerate(dims, start=1):
        key, kw, kb = jax.random.split(key, 3)
        bound = 1.0 / jnp.sqrt(jnp.float32(fan_in))
        params[f"w{idx}"] = jax.random.uniform(
            kw, (fan_in, fan_out), jnp.float32, -bound, bound)
        params[f"b{idx}"] = jax.random.uniform(
            kb, (1, fan_out), jnp.float32, -bound, bound)
    return params


def reference_forward(x, p):
    h = jax.nn.sigmoid(x @ p["w1"].astype(jnp.float32) + p["b1"].astype(jnp.float32))
    h = jax.nn.sigmoid(h @ p["w2"].astype(jnp.float32) + p["b2"].astype(jnp.float32))
    h = jnp.maximum(h @ p["w3"].astype(jnp.float32) + p["b3"].astype(jnp.float32), 0.0)
    return h @ p["w4"].astype(jnp.float32) + p["b4"].astype(jnp.float32)


if __name__ == "__main__":
    key = jax.random.PRNGKey(0)
    # NOTE: feature widths come from the module spec; they are lane-sparse
    # (<128), so the MXU/store lanes run partially padded — unavoidable without
    # changing the model dims. The large batch tile keeps that cost amortized.
    batch, n_input, n_h1, n_h2, n_h3, n_output = 256, 32, 64, 64, 32, 16

    kx, kp = jax.random.split(key)
    x = jax.random.normal(kx, (batch, n_input), jnp.float32)
    params = init_params(kp, n_input, n_h1, n_h2, n_h3, n_output)

    # f32 weights: exact semantics of the PyTorch module.
    out = jax.block_until_ready(net_forward(x, params, tile_b=128))
    ref = reference_forward(x, params)
    assert out.shape == (batch, n_output)
    assert jnp.allclose(out, ref, atol=1e-5, rtol=1e-5)

    # bf16 weights: halved weight/activation matmul bytes on bf16-native MXUs
    # (v6e/v7x); accumulation stays f32 inside the kernel.
    params_bf16 = {k: v.astype(jnp.bfloat16) for k, v in params.items()}
    out_bf16 = jax.block_until_ready(net_forward(x, params_bf16, tile_b=128))
    assert out_bf16.shape == (batch, n_output)
    assert jnp.allclose(out_bf16, ref, atol=3e-2, rtol=3e-2)

    print("KERNEL_OK")
</pallas_src>

<mosaic_0001>
module attributes {stable_mosaic.version = 11 : i64} {
  func.func @mlp_kernel(%arg0: i32, %arg1: memref<128x32xf32, #tpu.memory_space<vmem>>, %arg2: memref<32x64xf32, #tpu.memory_space<vmem>>, %arg3: memref<1x64xf32, #tpu.memory_space<vmem>>, %arg4: memref<64x64xf32, #tpu.memory_space<vmem>>, %arg5: memref<1x64xf32, #tpu.memory_space<vmem>>, %arg6: memref<64x32xf32, #tpu.memory_space<vmem>>, %arg7: memref<1x32xf32, #tpu.memory_space<vmem>>, %arg8: memref<32x16xf32, #tpu.memory_space<vmem>>, %arg9: memref<1x16xf32, #tpu.memory_space<vmem>>, %arg10: memref<128x16xf32, #tpu.memory_space<vmem>>) attributes {dimension_semantics = [#tpu.dimension_semantics<parallel>], iteration_bounds = array<i64: 2>, scalar_prefetch = 0 : i64, scratch_operands = 0 : i64, tpu.core_type = #tpu.core_type<tc>, window_params = [{transform_indices = @transform_0, window_bounds = array<i64: 128, 32>}, {pipeline_mode = #tpu.pipeline_mode<synchronous>, transform_indices = @transform_1, window_bounds = array<i64: 32, 64>}, {pipeline_mode = #tpu.pipeline_mode<synchronous>, transform_indices = @transform_2, window_bounds = array<i64: 1, 64>}, {pipeline_mode = #tpu.pipeline_mode<synchronous>, transform_indices = @transform_3, window_bounds = array<i64: 64, 64>}, {pipeline_mode = #tpu.pipeline_mode<synchronous>, transform_indices = @transform_4, window_bounds = array<i64: 1, 64>}, {pipeline_mode = #tpu.pipeline_mode<synchronous>, transform_indices = @transform_5, window_bounds = array<i64: 64, 32>}, {pipeline_mode = #tpu.pipeline_mode<synchronous>, transform_indices = @transform_6, window_bounds = array<i64: 1, 32>}, {pipeline_mode = #tpu.pipeline_mode<synchronous>, transform_indices = @transform_7, window_bounds = array<i64: 32, 16>}, {pipeline_mode = #tpu.pipeline_mode<synchronous>, transform_indices = @transform_8, window_bounds = array<i64: 1, 16>}, {transform_indices = @transform_9, window_bounds = array<i64: 128, 16>}]} {
    %c0 = arith.constant 0 : index
    %c0_0 = arith.constant 0 : index
    %0 = vector.load %arg1[%c0, %c0_0] : memref<128x32xf32, #tpu.memory_space<vmem>>, vector<128x32xf32>
    %c0_1 = arith.constant 0 : index
    %c0_2 = arith.constant 0 : index
    %1 = vector.load %arg2[%c0_1, %c0_2] : memref<32x64xf32, #tpu.memory_space<vmem>>, vector<32x64xf32>
    %cst = arith.constant dense<0.000000e+00> : vector<128x64xf32>
    %2 = tpu.matmul %0, %1, %cst {dimension_numbers = #tpu.dot_dimension_numbers<[1], [0], [0], [1], [0, 0, 1, 1], [], []>} : vector<128x32xf32>, vector<32x64xf32>, vector<128x64xf32> -> vector<128x64xf32>
    %c0_3 = arith.constant 0 : index
    %c0_4 = arith.constant 0 : index
    %3 = vector.load %arg3[%c0_3, %c0_4] : memref<1x64xf32, #tpu.memory_space<vmem>>, vector<1x64xf32>
    %4 = vector.broadcast %3 : vector<1x64xf32> to vector<128x64xf32>
    %5 = arith.addf %2, %4 : vector<128x64xf32>
    %6 = arith.negf %5 : vector<128x64xf32>
    %7 = math.exp %6 : vector<128x64xf32>
    %cst_5 = arith.constant 1.000000e+00 : f32
    %8 = vector.broadcast %cst_5 : f32 to vector<128x64xf32>
    %9 = arith.addf %8, %7 : vector<128x64xf32>
    %10 = arith.divf %8, %9 : vector<128x64xf32>
    %c0_6 = arith.constant 0 : index
    %c0_7 = arith.constant 0 : index
    %11 = vector.load %arg4[%c0_6, %c0_7] : memref<64x64xf32, #tpu.memory_space<vmem>>, vector<64x64xf32>
    %cst_8 = arith.constant dense<0.000000e+00> : vector<128x64xf32>
    %12 = tpu.matmul %10, %11, %cst_8 {dimension_numbers = #tpu.dot_dimension_numbers<[1], [0], [0], [1], [0, 0, 1, 1], [], []>} : vector<128x64xf32>, vector<64x64xf32>, vector<128x64xf32> -> vector<128x64xf32>
    %c0_9 = arith.constant 0 : index
    %c0_10 = arith.constant 0 : index
    %13 = vector.load %arg5[%c0_9, %c0_10] : memref<1x64xf32, #tpu.memory_space<vmem>>, vector<1x64xf32>
    %14 = vector.broadcast %13 : vector<1x64xf32> to vector<128x64xf32>
    %15 = arith.addf %12, %14 : vector<128x64xf32>
    %16 = arith.negf %15 : vector<128x64xf32>
    %17 = math.exp %16 : vector<128x64xf32>
    %cst_11 = arith.constant 1.000000e+00 : f32
    %18 = vector.broadcast %cst_11 : f32 to vector<128x64xf32>
    %19 = arith.addf %18, %17 : vector<128x64xf32>
    %20 = arith.divf %18, %19 : vector<128x64xf32>
    %c0_12 = arith.constant 0 : index
    %c0_13 = arith.constant 0 : index
    %21 = vector.load %arg6[%c0_12, %c0_13] : memref<64x32xf32, #tpu.memory_space<vmem>>, vector<64x32xf32>
    %cst_14 = arith.constant dense<0.000000e+00> : vector<128x32xf32>
    %22 = tpu.matmul %20, %21, %cst_14 {dimension_numbers = #tpu.dot_dimension_numbers<[1], [0], [0], [1], [0, 0, 1, 1], [], []>} : vector<128x64xf32>, vector<64x32xf32>, vector<128x32xf32> -> vector<128x32xf32>
    %c0_15 = arith.constant 0 : index
    %c0_16 = arith.constant 0 : index
    %23 = vector.load %arg7[%c0_15, %c0_16] : memref<1x32xf32, #tpu.memory_space<vmem>>, vector<1x32xf32>
    %24 = vector.broadcast %23 : vector<1x32xf32> to vector<128x32xf32>
    %25 = arith.addf %22, %24 : vector<128x32xf32>
    %cst_17 = arith.constant 0.000000e+00 : f32
    %26 = vector.broadcast %cst_17 : f32 to vector<128x32xf32>
    %27 = arith.maximumf %25, %26 : vector<128x32xf32>
    %c0_18 = arith.constant 0 : index
    %c0_19 = arith.constant 0 : index
    %28 = vector.load %arg8[%c0_18, %c0_19] : memref<32x16xf32, #tpu.memory_space<vmem>>, vector<32x16xf32>
    %cst_20 = arith.constant dense<0.000000e+00> : vector<128x16xf32>
    %29 = tpu.matmul %27, %28, %cst_20 {dimension_numbers = #tpu.dot_dimension_numbers<[1], [0], [0], [1], [0, 0, 1, 1], [], []>} : vector<128x32xf32>, vector<32x16xf32>, vector<128x16xf32> -> vector<128x16xf32>
    %c0_21 = arith.constant 0 : index
    %c0_22 = arith.constant 0 : index
    %30 = vector.load %arg9[%c0_21, %c0_22] : memref<1x16xf32, #tpu.memory_space<vmem>>, vector<1x16xf32>
    %31 = vector.broadcast %30 : vector<1x16xf32> to vector<128x16xf32>
    %32 = arith.addf %29, %31 : vector<128x16xf32>
    %c0_23 = arith.constant 0 : index
    %c0_24 = arith.constant 0 : index
    %33 = vector.load %arg10[%c0_23, %c0_24] : memref<128x16xf32, #tpu.memory_space<vmem>>, vector<128x16xf32>
    tpu.vector_store %arg10[%c0_23, %c0_24], %32 {strides = array<i32>} : memref<128x16xf32, #tpu.memory_space<vmem>>, vector<128x16xf32>,
    return
  }
  func.func @transform_0(%arg0: i32) -> (i32, i32) {
    %c0_i32 = arith.constant 0 : i32
    %c0_i32_0 = arith.constant 0 : i32
    return %arg0, %c0_i32 : i32, i32
  }
  func.func @transform_1(%arg0: i32) -> (i32, i32) {
    %c0_i32 = arith.constant 0 : i32
    %c0_i32_0 = arith.constant 0 : i32
    %c0_i32_1 = arith.constant 0 : i32
    return %c0_i32, %c0_i32_0 : i32, i32
  }
  func.func @transform_2(%arg0: i32) -> (i32, i32) {
    %c0_i32 = arith.constant 0 : i32
    %c0_i32_0 = arith.constant 0 : i32
    %c0_i32_1 = arith.constant 0 : i32
    return %c0_i32, %c0_i32_0 : i32, i32
  }
  func.func @transform_3(%arg0: i32) -> (i32, i32) {
    %c0_i32 = arith.constant 0 : i32
    %c0_i32_0 = arith.constant 0 : i32
    %c0_i32_1 = arith.constant 0 : i32
    return %c0_i32, %c0_i32_0 : i32, i32
  }
  func.func @transform_4(%arg0: i32) -> (i32, i32) {
    %c0_i32 = arith.constant 0 : i32
    %c0_i32_0 = arith.constant 0 : i32
    %c0_i32_1 = arith.constant 0 : i32
    return %c0_i32, %c0_i32_0 : i32, i32
  }
  func.func @transform_5(%arg0: i32) -> (i32, i32) {
    %c0_i32 = arith.constant 0 : i32
    %c0_i32_0 = arith.constant 0 : i32
    %c0_i32_1 = arith.constant 0 : i32
    return %c0_i32, %c0_i32_0 : i32, i32
  }
  func.func @transform_6(%arg0: i32) -> (i32, i32) {
    %c0_i32 = arith.constant 0 : i32
    %c0_i32_0 = arith.constant 0 : i32
    %c0_i32_1 = arith.constant 0 : i32
    return %c0_i32, %c0_i32_0 : i32, i32
  }
  func.func @transform_7(%arg0: i32) -> (i32, i32) {
    %c0_i32 = arith.constant 0 : i32
    %c0_i32_0 = arith.constant 0 : i32
    %c0_i32_1 = arith.constant 0 : i32
    return %c0_i32, %c0_i32_0 : i32, i32
  }
  func.func @transform_8(%arg0: i32) -> (i32, i32) {
    %c0_i32 = arith.constant 0 : i32
    %c0_i32_0 = arith.constant 0 : i32
    %c0_i32_1 = arith.constant 0 : i32
    return %c0_i32, %c0_i32_0 : i32, i32
  }
  func.func @transform_9(%arg0: i32) -> (i32, i32) {
    %c0_i32 = arith.constant 0 : i32
    %c0_i32_0 = arith.constant 0 : i32
    return %arg0, %c0_i32 : i32, i32
  }
}

</mosaic_0001>

<llo_original>
// kernel: tpu_custom_call.1
$region0: #{tpu_custom_call.1}
  #allocation0 [shape = 'u32[]', space=smem, size = 0x4, offset = 0x4, fixed_abs, tag = 'smem constant byte address 0x4 - core index']
  #allocation1 [shape = 'u32[144,128]{1,0:T(1,128)}', space=vmem, size = 0x12000, scoped, tag = 'internal scratch']
  %s0 = inlined_call_operand.vmem [shape: f32[256,32], index: 0, kind: input, shape index: {}]
  %s1 = inlined_call_operand.vmem [shape: f32[32,64], index: 1, kind: input, shape index: {}]
  %s2 = inlined_call_operand.vmem [shape: f32[1,64], index: 2, kind: input, shape index: {}]
  %s3 = inlined_call_operand.vmem [shape: f32[64,64], index: 3, kind: input, shape index: {}]
  %s4 = inlined_call_operand.vmem [shape: f32[1,64], index: 4, kind: input, shape index: {}]
  %s5 = inlined_call_operand.vmem [shape: f32[64,32], index: 5, kind: input, shape index: {}]
  %s6 = inlined_call_operand.vmem [shape: f32[1,32], index: 6, kind: input, shape index: {}]
  %s7 = inlined_call_operand.vmem [shape: f32[32,16], index: 7, kind: input, shape index: {}]
  %s8 = inlined_call_operand.vmem [shape: f32[1,16], index: 8, kind: input, shape index: {}]
  %s9 = inlined_call_operand.vmem [shape: f32[256,16], index: 9, kind: output, shape index: {}]
  %s10 = sld [smem:[#allocation0]]
  $region69: #{tpu_custom_call.1} parent=0
    _
  %s12 = ssub.s32 1, %s10
  %s13 = scalar_select 0, %s12, %s10
  loop: start=0, step=1, limit=4
  $region2: #{tpu_custom_call.1} parent=0 // loop_pre_header
    _
  $region3: #{tpu_custom_call.1} parent=0 // loop_header
    %s15 = sphi 0, %s19
    %p16 = scmp.ge.s32.totalorder %s15, 4
    %s25 = sphi 0, %s27
    %s28 = sphi 0, %s25
    %s29 = sphi 0, %s28
    %s45 = sphi 0, %s29
    %s49 = sphi 0, %s49
    %s51 = sphi 0, %s49
    %s52 = sphi 0, %s51
    %s66 = sphi 0, %s52
    %s70 = sphi 0, %s70
    %s72 = sphi 0, %s70
    %s73 = sphi 0, %s72
    %s87 = sphi 0, %s73
    %s91 = sphi 0, %s91
    %s93 = sphi 0, %s91
    %s94 = sphi 0, %s93
    %s108 = sphi 0, %s94
    %s112 = sphi 0, %s112
    %s114 = sphi 0, %s112
    %s115 = sphi 0, %s114
    %s129 = sphi 0, %s115
    %s133 = sphi 0, %s133
    %s135 = sphi 0, %s133
    %s136 = sphi 0, %s135
    %s150 = sphi 0, %s136
    %s154 = sphi 0, %s154
    %s156 = sphi 0, %s154
    %s157 = sphi 0, %s156
    %s171 = sphi 0, %s157
    %s175 = sphi 0, %s175
    %s177 = sphi 0, %s175
    %s178 = sphi 0, %s177
    %s192 = sphi 0, %s178
    %s196 = sphi 0, %s196
    %s198 = sphi 0, %s196
    %s199 = sphi 0, %s198
    %s213 = sphi 0, %s199
    %s219 = sphi 0, %s221
    %s222 = sphi 0, %s219
    %s223 = sphi 0, %s222
    %s239 = sphi 0, %s223
  $region4: #{tpu_custom_call.1} parent=0 // loop_header_branch
    %18 = sbr.rel (%p16) target = $region8
  $region5: #{tpu_custom_call.1} parent=0 // loop_body
    %s20 = ssub.s32 %s15, 1
    %s21 = ssub.s32 %s15, 2
    %s22 = sadd.s32 %s15, 1
    %s23 = ssub.s32 %s15, %s22
    %p24 = scmp.eq.s32.totalorder %s23, 0
    %s26 = sadd.s32 %s25, 1
    %s27 = scalar_select %p24, %s25, %s26
    %p30 = pneg %p24
    %p31 = scmp.eq.s32.totalorder %s15, 1
    %p32 = por %p30, %p31
    %p33 = scmp.ne.s32.totalorder %s25, %s28
    %p34 = scmp.eq.s32.totalorder %s15, 0
    %p35 = por %p33, %p34
    %p36 = scmp.ne.s32.totalorder %s25, %s28
    %p37 = scmp.eq.s32.totalorder %s20, 1
    %p38 = por %p36, %p37
    %p39 = scmp.ne.s32.totalorder %s28, %s29
    %p40 = scmp.eq.s32.totalorder %s20, 0
    %p41 = por %p39, %p40
    %p42 = scmp.ne.s32.totalorder %s28, %s29
    %p43 = scmp.eq.s32.totalorder %s21, 1
    %p44 = por %p42, %p43
    %p46 = scmp.ne.s32.totalorder %s29, %s45
    %p47 = scmp.eq.s32.totalorder %s21, 0
    %p48 = por %p46, %p47
    %s50 = sadd.s32 %s49, 1
    %p53 = scmp.eq.s32.totalorder %s15, 1
    %p54 = scmp.ne.s32.totalorder %s49, %s51
    %p55 = scmp.eq.s32.totalorder %s15, 0
    %p56 = por %p54, %p55
    %p57 = scmp.ne.s32.totalorder %s49, %s51
    %p58 = scmp.eq.s32.totalorder %s20, 1
    %p59 = por %p57, %p58
    %p60 = scmp.ne.s32.totalorder %s51, %s52
    %p61 = scmp.eq.s32.totalorder %s20, 0
    %p62 = por %p60, %p61
    %p63 = scmp.ne.s32.totalorder %s51, %s52
    %p64 = scmp.eq.s32.totalorder %s21, 1
    %p65 = por %p63, %p64
    %p67 = scmp.ne.s32.totalorder %s52, %s66
    %p68 = scmp.eq.s32.totalorder %s21, 0
    %p69 = por %p67, %p68
    %s71 = sadd.s32 %s70, 1
    %p74 = scmp.eq.s32.totalorder %s15, 1
    %p75 = scmp.ne.s32.totalorder %s70, %s72
    %p76 = scmp.eq.s32.totalorder %s15, 0
    %p77 = por %p75, %p76
    %p78 = scmp.ne.s32.totalorder %s70, %s72
    %p79 = scmp.eq.s32.totalorder %s20, 1
    %p80 = por %p78, %p79
    %p81 = scmp.ne.s32.totalorder %s72, %s73
    %p82 = scmp.eq.s32.totalorder %s20, 0
    %p83 = por %p81, %p82
    %p84 = scmp.ne.s32.totalorder %s72, %s73
    %p85 = scmp.eq.s32.totalorder %s21, 1
    %p86 = por %p84, %p85
    %p88 = scmp.ne.s32.totalorder %s73, %s87
    %p89 = scmp.eq.s32.totalorder %s21, 0
    %p90 = por %p88, %p89
    %s92 = sadd.s32 %s91, 1
    %p95 = scmp.eq.s32.totalorder %s15, 1
    %p96 = scmp.ne.s32.totalorder %s91, %s93
    %p97 = scmp.eq.s32.totalorder %s15, 0
    %p98 = por %p96, %p97
    %p99 = scmp.ne.s32.totalorder %s91, %s93
    %p100 = scmp.eq.s32.totalorder %s20, 1
    %p101 = por %p99, %p100
    %p102 = scmp.ne.s32.totalorder %s93, %s94
    %p103 = scmp.eq.s32.totalorder %s20, 0
    %p104 = por %p102, %p103
    %p105 = scmp.ne.s32.totalorder %s93, %s94
    %p106 = scmp.eq.s32.totalorder %s21, 1
    %p107 = por %p105, %p106
    %p109 = scmp.ne.s32.totalorder %s94, %s108
    %p110 = scmp.eq.s32.totalorder %s21, 0
    %p111 = por %p109, %p110
    %s113 = sadd.s32 %s112, 1
    %p116 = scmp.eq.s32.totalorder %s15, 1
    %p117 = scmp.ne.s32.totalorder %s112, %s114
    %p118 = scmp.eq.s32.totalorder %s15, 0
    %p119 = por %p117, %p118
    %p120 = scmp.ne.s32.totalorder %s112, %s114
    %p121 = scmp.eq.s32.totalorder %s20, 1
    %p122 = por %p120, %p121
    %p123 = scmp.ne.s32.totalorder %s114, %s115
    %p124 = scmp.eq.s32.totalorder %s20, 0
    %p125 = por %p123, %p124
    %p126 = scmp.ne.s32.totalorder %s114, %s115
    %p127 = scmp.eq.s32.totalorder %s21, 1
    %p128 = por %p126, %p127
    %p130 = scmp.ne.s32.totalorder %s115, %s129
    %p131 = scmp.eq.s32.totalorder %s21, 0
    %p132 = por %p130, %p131
    %s134 = sadd.s32 %s133, 1
    %p137 = scmp.eq.s32.totalorder %s15, 1
    %p138 = scmp.ne.s32.totalorder %s133, %s135
    %p139 = scmp.eq.s32.totalorder %s15, 0
    %p140 = por %p138, %p139
    %p141 = scmp.ne.s32.totalorder %s133, %s135
    %p142 = scmp.eq.s32.totalorder %s20, 1
    %p143 = por %p141, %p142
    %p144 = scmp.ne.s32.totalorder %s135, %s136
    %p145 = scmp.eq.s32.totalorder %s20, 0
    %p146 = por %p144, %p145
    %p147 = scmp.ne.s32.totalorder %s135, %s136
    %p148 = scmp.eq.s32.totalorder %s21, 1
    %p149 = por %p147, %p148
    %p151 = scmp.ne.s32.totalorder %s136, %s150
    %p152 = scmp.eq.s32.totalorder %s21, 0
    %p153 = por %p151, %p152
    %s155 = sadd.s32 %s154, 1
    %p158 = scmp.eq.s32.totalorder %s15, 1
    %p159 = scmp.ne.s32.totalorder %s154, %s156
    %p160 = scmp.eq.s32.totalorder %s15, 0
    %p161 = por %p159, %p160
    %p162 = scmp.ne.s32.totalorder %s154, %s156
    %p163 = scmp.eq.s32.totalorder %s20, 1
    %p164 = por %p162, %p163
    %p165 = scmp.ne.s32.totalorder %s156, %s157
    %p166 = scmp.eq.s32.totalorder %s20, 0
    %p167 = por %p165, %p166
    %p168 = scmp.ne.s32.totalorder %s156, %s157
    %p169 = scmp.eq.s32.totalorder %s21, 1
    %p170 = por %p168, %p169
    %p172 = scmp.ne.s32.totalorder %s157, %s171
    %p173 = scmp.eq.s32.totalorder %s21, 0
    %p174 = por %p172, %p173
    %s176 = sadd.s32 %s175, 1
    %p179 = scmp.eq.s32.totalorder %s15, 1
    %p180 = scmp.ne.s32.totalorder %s175, %s177
    %p181 = scmp.eq.s32.totalorder %s15, 0
    %p182 = por %p180, %p181
    %p183 = scmp.ne.s32.totalorder %s175, %s177
    %p184 = scmp.eq.s32.totalorder %s20, 1
    %p185 = por %p183, %p184
    %p186 = scmp.ne.s32.totalorder %s177, %s178
    %p187 = scmp.eq.s32.totalorder %s20, 0
    %p188 = por %p186, %p187
    %p189 = scmp.ne.s32.totalorder %s177, %s178
    %p190 = scmp.eq.s32.totalorder %s21, 1
    %p191 = por %p189, %p190
    %p193 = scmp.ne.s32.totalorder %s178, %s192
    %p194 = scmp.eq.s32.totalorder %s21, 0
    %p195 = por %p193, %p194
    %s197 = sadd.s32 %s196, 1
    %p200 = scmp.eq.s32.totalorder %s15, 1
    %p201 = scmp.ne.s32.totalorder %s196, %s198
    %p202 = scmp.eq.s32.totalorder %s15, 0
    %p203 = por %p201, %p202
    %p204 = scmp.ne.s32.totalorder %s196, %s198
    %p205 = scmp.eq.s32.totalorder %s20, 1
    %p206 = por %p204, %p205
    %p207 = scmp.ne.s32.totalorder %s198, %s199
    %p208 = scmp.eq.s32.totalorder %s20, 0
    %p209 = por %p207, %p208
    %p210 = scmp.ne.s32.totalorder %s198, %s199
    %p211 = scmp.eq.s32.totalorder %s21, 1
    %p212 = por %p210, %p211
    %p214 = scmp.ne.s32.totalorder %s199, %s213
    %p215 = scmp.eq.s32.totalorder %s21, 0
    %p216 = por %p214, %p215
    %s217 = ssub.s32 %s15, %s22
    %p218 = scmp.eq.s32.totalorder %s217, 0
    %s220 = sadd.s32 %s219, 1
    %s221 = scalar_select %p218, %s219, %s220
    %p224 = pneg %p218
    %p225 = scmp.eq.s32.totalorder %s15, 1
    %p226 = por %p224, %p225
    %p227 = scmp.ne.s32.totalorder %s219, %s222
    %p228 = scmp.eq.s32.totalorder %s15, 0
    %p229 = por %p227, %p228
    %p230 = scmp.ne.s32.totalorder %s219, %s222
    %p231 = scmp.eq.s32.totalorder %s20, 1
    %p232 = por %p230, %p231
    %p233 = scmp.ne.s32.totalorder %s222, %s223
    %p234 = scmp.eq.s32.totalorder %s20, 0
    %p235 = por %p233, %p234
    %p236 = scmp.ne.s32.totalorder %s222, %s223
    %p237 = scmp.eq.s32.totalorder %s21, 1
    %p238 = por %p236, %p237
    %p240 = scmp.ne.s32.totalorder %s223, %s239
    %p241 = scmp.eq.s32.totalorder %s21, 0
    %p242 = por %p240, %p241
    %p243 = scmp.le.s32.totalorder 1, %s15
    %p244 = scmp.lt.s32.totalorder %s15, 3
    %p245 = pnand %p243, %p244
    %p246 = pneg %p245
    // Predicated region
    $region9: #{tpu_custom_call.1} parent=5 // pred_check
      _
    $region10: #{tpu_custom_call.1} parent=5 // pred_check_branch
      %248 = sbr.rel (%p245) target = $region12
    $region11: #{tpu_custom_call.1} parent=5 // pred_region
      %s249 = ssub.s32 %s15, 1
      // Predicated region
      $region13: #{tpu_custom_call.1} parent=11 // pred_check
        %p250 = pneg %p62
      $region14: #{tpu_custom_call.1} parent=11 // pred_check_branch
        %252 = sbr.rel (%p250) target = $region16
      $region15: #{tpu_custom_call.1} parent=11 // pred_region
        _
      $region16: #{tpu_custom_call.1} parent=11 // pred_fallthru
        _
      // Predicated region
      $region17: #{tpu_custom_call.1} parent=11 // pred_check
        %p253 = pneg %p83
      $region18: #{tpu_custom_call.1} parent=11 // pred_check_branch
        %255 = sbr.rel (%p253) target = $region20
      $region19: #{tpu_custom_call.1} parent=11 // pred_region
        _
      $region20: #{tpu_custom_call.1} parent=11 // pred_fallthru
        _
      // Predicated region
      $region21: #{tpu_custom_call.1} parent=11 // pred_check
        %p256 = pneg %p104
      $region22: #{tpu_custom_call.1} parent=11 // pred_check_branch
        %258 = sbr.rel (%p256) target = $region24
      $region23: #{tpu_custom_call.1} parent=11 // pred_region
        _
      $region24: #{tpu_custom_call.1} parent=11 // pred_fallthru
        _
      // Predicated region
      $region25: #{tpu_custom_call.1} parent=11 // pred_check
        %p259 = pneg %p125
      $region26: #{tpu_custom_call.1} parent=11 // pred_check_branch
        %261 = sbr.rel (%p259) target = $region28
      $region27: #{tpu_custom_call.1} parent=11 // pred_region
        _
      $region28: #{tpu_custom_call.1} parent=11 // pred_fallthru
        _
      // Predicated region
      $region29: #{tpu_custom_call.1} parent=11 // pred_check
        %p262 = pneg %p146
      $region30: #{tpu_custom_call.1} parent=11 // pred_check_branch
        %264 = sbr.rel (%p262) target = $region32
      $region31: #{tpu_custom_call.1} parent=11 // pred_region
        _
      $region32: #{tpu_custom_call.1} parent=11 // pred_fallthru
        _
      // Predicated region
      $region33: #{tpu_custom_call.1} parent=11 // pred_check
        %p265 = pneg %p167
      $region34: #{tpu_custom_call.1} parent=11 // pred_check_branch
        %267 = sbr.rel (%p265) target = $region36
      $region35: #{tpu_custom_call.1} parent=11 // pred_region
        _
      $region36: #{tpu_custom_call.1} parent=11 // pred_fallthru
        _
      // Predicated region
      $region37: #{tpu_custom_call.1} parent=11 // pred_check
        %p268 = pneg %p188
      $region38: #{tpu_custom_call.1} parent=11 // pred_check_branch
        %270 = sbr.rel (%p268) target = $region40
      $region39: #{tpu_custom_call.1} parent=11 // pred_region
        _
      $region40: #{tpu_custom_call.1} parent=11 // pred_fallthru
        _
      // Predicated region
      $region41: #{tpu_custom_call.1} parent=11 // pred_check
        %p271 = pneg %p209
      $region42: #{tpu_custom_call.1} parent=11 // pred_check_branch
        %273 = sbr.rel (%p271) target = $region44
      $region43: #{tpu_custom_call.1} parent=11 // pred_region
        _
      $region44: #{tpu_custom_call.1} parent=11 // pred_fallthru
        _
    $region12: #{tpu_custom_call.1} parent=5 // pred_fallthru
      _
    %p274 = scmp.lt.s32.totalorder %s15, 2
    // Predicated region
    $region45: #{tpu_custom_call.1} parent=5 // pred_check
      %p275 = pneg %p274
    $region46: #{tpu_custom_call.1} parent=5 // pred_check_branch
      %277 = sbr.rel (%p275) target = $region48
    $region47: #{tpu_custom_call.1} parent=5 // pred_region
      // Predicated region
      $region49: #{tpu_custom_call.1} parent=47 // pred_check
        %p278 = pneg %p35
      $region50: #{tpu_custom_call.1} parent=47 // pred_check_branch
        %280 = sbr.rel (%p278) target = $region52
      $region51: #{tpu_custom_call.1} parent=47 // pred_region
        %s281 = smul.u32 16, %s15
        %p282 = scmp.lt.s32.totalorder %s281, 31
        %s283 = scalar_select %p282, %s281, 31
        %s284 = smul.addr %s283, 8
        %s285 = scalar_lea.vmem %s0, %s284
        %s286 = smul.u32 16, %s15
      $region52: #{tpu_custom_call.1} parent=47 // pred_fallthru
        _
    $region48: #{tpu_custom_call.1} parent=5 // pred_fallthru
      _
    %p287 = scmp.le.s32.totalorder 1, %s15
    %p288 = scmp.lt.s32.totalorder %s15, 3
    %p289 = pnand %p287, %p288
    %p290 = pneg %p289
    // Predicated region
    $region53: #{tpu_custom_call.1} parent=5 // pred_check
      _
    $region54: #{tpu_custom_call.1} parent=5 // pred_check_branch
      %292 = sbr.rel (%p289) target = $region56
    $region55: #{tpu_custom_call.1} parent=5 // pred_region
      %s293 = ssub.s32 %s15, 1
      %s294 = smul.u32 16, %s20
      %p295 = scmp.lt.s32.totalorder %s294, 31
      %s296 = scalar_select %p295, %s294, 31
      %s297 = smul.addr %s296, 8
      %s298 = scalar_lea.vmem %s0, %s297
      %p299 = pneg %p41
      %p300 = pneg %p38
      %p301 = pneg %p62
      %p302 = pneg %p59
      %p303 = pneg %p83
      %p304 = pneg %p80
      %p305 = pneg %p104
      %p306 = pneg %p101
      %p307 = pneg %p125
      %p308 = pneg %p122
      %p309 = pneg %p146
      %p310 = pneg %p143
      %p311 = pneg %p167
      %p312 = pneg %p164
      %p313 = pneg %p188
      %p314 = pneg %p185
      %p315 = pneg %p209
      %p316 = pneg %p206
      %p317 = pneg %p235
      %p318 = pneg %p232
      %s319 = smul.u32 16, %s20
      %p320 = scmp.lt.s32.totalorder %s319, 31
      %s321 = scalar_select %p320, %s319, 31
      %s322 = smul.addr %s321, 8
      %s323 = scalar_lea.vmem %s9, %s322
      %s324 = smul.u32 16, %s20
      %p325 = scmp.lt.s32.totalorder %s324, 31
      %s326 = scalar_select %p325, %s324, 31
      %s327 = smul.addr %s326, 8
      %s328 = scalar_lea.vmem %s0, %s327
      %s329 = smul.u32 16, %s20
      %s330 = smul.u32 16, %s20
      %p331 = scmp.lt.s32.totalorder %s330, 31
      %s332 = scalar_select %p331, %s330, 31
      %s333 = smul.addr %s332, 8
      %s334 = scalar_lea.vmem %s9, %s333
      %s335 = smul.u32 16, %s20
      %v336 = vld [vmem:[%s328] sm:$0xff]
      %v337 = vld [vmem:[%s328 + $0x8] sm:$0xff]
      %v338 = vld [vmem:[%s328 + $0x10] sm:$0xff]
      %v339 = vld [vmem:[%s328 + $0x18] sm:$0xff]
      %v340 = vld [vmem:[%s328 + $0x20] sm:$0xff]
      %v341 = vld [vmem:[%s328 + $0x28] sm:$0xff]
      %v342 = vld [vmem:[%s328 + $0x30] sm:$0xff]
      %v343 = vld [vmem:[%s328 + $0x38] sm:$0xff]
      %v344 = vld [vmem:[%s328 + $0x40] sm:$0xff]
      %v345 = vld [vmem:[%s328 + $0x48] sm:$0xff]
      %v346 = vld [vmem:[%s328 + $0x50] sm:$0xff]
      %v347 = vld [vmem:[%s328 + $0x58] sm:$0xff]
      %v348 = vld [vmem:[%s328 + $0x60] sm:$0xff]
      %v349 = vld [vmem:[%s328 + $0x68] sm:$0xff]
      %v350 = vld [vmem:[%s328 + $0x70] sm:$0xff]
      %v351 = vld [vmem:[%s328 + $0x78] sm:$0xff]
      %v352 = vld [vmem:[%s1] sm:$0xff]
      %v353 = vld [vmem:[%s1 + $0x8] sm:$0xff]
      %v354 = vld [vmem:[%s1 + $0x10] sm:$0xff]
      %v355 = vld [vmem:[%s1 + $0x18] sm:$0xff]
      %v356 = vld [vmem:[%s2] sm:$0x1]
      %v358 = vlaneseq
      %v359 = vshrl.u32 %v358, 7
      %v360 = vsub.s32 0, %v359
      %v361 = vrot.slane %v356, %v360
      %vm363 = vcmask 261120
      %v365 = vsel %vm363, %v336, 0
      %v368 = vsel %vm363, %v337, 0
      %v371 = vsel %vm363, %v338, 0
      %v374 = vsel %vm363, %v339, 0
      %v377 = vsel %vm363, %v340, 0
      %v380 = vsel %vm363, %v341, 0
      %v383 = vsel %vm363, %v342, 0
      %v386 = vsel %vm363, %v343, 0
      %v389 = vsel %vm363, %v344, 0
      %v392 = vsel %vm363, %v345, 0
      %v395 = vsel %vm363, %v346, 0
      %v398 = vsel %vm363, %v347, 0
      %v401 = vsel %vm363, %v348, 0
      %v404 = vsel %vm363, %v349, 0
      %v407 = vsel %vm363, %v350, 0
      %v410 = vsel %vm363, %v351, 0
      %412 = vmatprep.subr.mxu0 0.0
      %413 = vmatpush1.msra.mxu0 %v352
      %414 = vmatprep.subr.mxu0 0.0
      %415 = vmatpush1.msra.mxu0 %v353
      %416 = vmatprep.subr.mxu0 0.0
      %417 = vmatpush1.msra.mxu0 %v354
      %418 = vmatprep.subr.mxu0 0.0
      %419 = vmatpush1.msra.mxu0 %v355
      %420 = vmatprep.subr.mxu0 0.0
      %421 = vmatpush1.msra.mxu0 0.0
      %422 = vmatprep.subr.mxu0 0.0
      %423 = vmatpush1.msra.mxu0 0.0
      %424 = vmatprep.subr.mxu0 0.0
      %425 = vmatpush1.msra.mxu0 0.0
      %426 = vmatprep.subr.mxu0 0.0
      %427 = vmatpush1.msra.mxu0 0.0
      %428 = vmatprep.subr.mxu0 0.0
      %429 = vmatpush1.msra.mxu0 0.0
      %430 = vmatprep.subr.mxu0 0.0
      %431 = vmatpush1.msra.mxu0 0.0
      %432 = vmatprep.subr.mxu0 0.0
      %433 = vmatpush1.msra.mxu0 0.0
      %434 = vmatprep.subr.mxu0 0.0
      %435 = vmatpush1.msra.mxu0 0.0
      %436 = vmatprep.subr.mxu0 0.0
      %437 = vmatpush1.msra.mxu0 0.0
      %438 = vmatprep.subr.mxu0 0.0
      %439 = vmatpush1.msra.mxu0 0.0
      %440 = vmatprep.subr.mxu0 0.0
      %441 = vmatpush1.msra.mxu0 0.0
      %442 = vmatprep.subr.mxu0 0.0
      %443 = vmatpush1.msra.mxu0 0.0
      %444 = vmatprep.subr.mxu0 0.0
      %445 = vmatpush1.msra.mxu0 0.0
      %446 = vmatprep.subr.mxu0 0.0
      %447 = vmatpush1.msra.mxu0 0.0
      %448 = vmatprep.subr.mxu0 0.0
      %449 = vmatpush1.msra.mxu0 0.0
      %450 = vmatprep.subr.mxu0 0.0
      %451 = vmatpush1.msra.mxu0 0.0
      %452 = vmatprep.subr.mxu0 0.0
      %453 = vmatpush1.msra.mxu0 0.0
      %454 = vmatprep.subr.mxu0 0.0
      %455 = vmatpush1.msra.mxu0 0.0
      %456 = vmatprep.subr.mxu0 0.0
      %457 = vmatpush1.msra.mxu0 0.0
      %458 = vmatprep.subr.mxu0 0.0
      %459 = vmatpush1.msra.mxu0 0.0
      %460 = vmatprep.subr.mxu0 0.0
      %461 = vmatpush1.msra.mxu0 0.0
      %462 = vmatprep.subr.mxu0 0.0
      %463 = vmatpush1.msra.mxu0 0.0
      %464 = vmatprep.subr.mxu0 0.0
      %465 = vmatpush1.msra.mxu0 0.0
      %466 = vmatprep.subr.mxu0 0.0
      %467 = vmatpush1.msra.mxu0 0.0
      %468 = vmatprep.subr.mxu0 0.0
      %469 = vmatpush1.msra.mxu0 0.0
      %470 = vmatprep.subr.mxu0 0.0
      %471 = vmatpush1.msra.mxu0 0.0
      %472 = vmatprep.subr.mxu0 0.0
      %473 = vmatpush1.msra.mxu0 0.0
      %474 = vmatprep.subr.mxu0 0.0
      %475 = vmatpush1.msra.mxu0 0.0
      %476 = vmatprep.mubr.f32.mxu0 0.0
      %477 = vmatmul.mubr.f32.gmra.mrb[0].mxu0 %v365
      %v478 = vpop.f32.mrb[0].mxu0
      %v479 = vadd.f32 %v361, %v478
      %v480 = vpop.f32.mrb[0].mxu0
      %481 = vmatprep.mubr.f32.mxu0 0.0
      %482 = vmatmul.mubr.f32.gmra.mrb[0].mxu0 %v368
      %v483 = vpop.f32.mrb[0].mxu0
      %v484 = vadd.f32 %v361, %v483
      %v485 = vpop.f32.mrb[0].mxu0
      %486 = vmatprep.mubr.f32.mxu0 0.0
      %487 = vmatmul.mubr.f32.gmra.mrb[0].mxu0 %v371
      %v488 = vpop.f32.mrb[0].mxu0
      %v489 = vadd.f32 %v361, %v488
      %v490 = vpop.f32.mrb[0].mxu0
      %491 = vmatprep.mubr.f32.mxu0 0.0
      %492 = vmatmul.mubr.f32.gmra.mrb[0].mxu0 %v374
      %v493 = vpop.f32.mrb[0].mxu0
      %v494 = vadd.f32 %v361, %v493
      %v495 = vpop.f32.mrb[0].mxu0
      %496 = vmatprep.mubr.f32.mxu0 0.0
      %497 = vmatmul.mubr.f32.gmra.mrb[0].mxu0 %v377
      %v498 = vpop.f32.mrb[0].mxu0
      %v499 = vadd.f32 %v361, %v498
      %v500 = vpop.f32.mrb[0].mxu0
      %501 = vmatprep.mubr.f32.mxu0 0.0
      %502 = vmatmul.mubr.f32.gmra.mrb[0].mxu0 %v380
      %v503 = vpop.f32.mrb[0].mxu0
      %v504 = vadd.f32 %v361, %v503
      %v505 = vpop.f32.mrb[0].mxu0
      %506 = vmatprep.mubr.f32.mxu0 0.0
      %507 = vmatmul.mubr.f32.gmra.mrb[0].mxu0 %v383
      %v508 = vpop.f32.mrb[0].mxu0
      %v509 = vadd.f32 %v361, %v508
      %v510 = vpop.f32.mrb[0].mxu0
      %511 = vmatprep.mubr.f32.mxu0 0.0
      %512 = vmatmul.mubr.f32.gmra.mrb[0].mxu0 %v386
      %v513 = vpop.f32.mrb[0].mxu0
      %v514 = vadd.f32 %v361, %v513
      %v515 = vpop.f32.mrb[0].mxu0
      %516 = vmatprep.mubr.f32.mxu0 0.0
      %517 = vmatmul.mubr.f32.gmra.mrb[0].mxu0 %v389
      %v518 = vpop.f32.mrb[0].mxu0
      %v519 = vadd.f32 %v361, %v518
      %v520 = vpop.f32.mrb[0].mxu0
      %521 = vmatprep.mubr.f32.mxu0 0.0
      %522 = vmatmul.mubr.f32.gmra.mrb[0].mxu0 %v392
      %v523 = vpop.f32.mrb[0].mxu0
      %v524 = vadd.f32 %v361, %v523
      %v525 = vpop.f32.mrb[0].mxu0
      %526 = vmatprep.mubr.f32.mxu0 0.0
      %527 = vmatmul.mubr.f32.gmra.mrb[0].mxu0 %v395
      %v528 = vpop.f32.mrb[0].mxu0
      %v529 = vadd.f32 %v361, %v528
      %v530 = vpop.f32.mrb[0].mxu0
      %531 = vmatprep.mubr.f32.mxu0 0.0
      %532 = vmatmul.mubr.f32.gmra.mrb[0].mxu0 %v398
      %v533 = vpop.f32.mrb[0].mxu0
      %v534 = vadd.f32 %v361, %v533
      %v535 = vpop.f32.mrb[0].mxu0
      %536 = vmatprep.mubr.f32.mxu0 0.0
      %537 = vmatmul.mubr.f32.gmra.mrb[0].mxu0 %v401
      %v538 = vpop.f32.mrb[0].mxu0
      %v539 = vadd.f32 %v361, %v538
      %v540 = vpop.f32.mrb[0].mxu0
      %541 = vmatprep.mubr.f32.mxu0 0.0
      %542 = vmatmul.mubr.f32.gmra.mrb[0].mxu0 %v404
      %v543 = vpop.f32.mrb[0].mxu0
      %v544 = vadd.f32 %v361, %v543
      %v545 = vpop.f32.mrb[0].mxu0
      %546 = vmatprep.mubr.f32.mxu0 0.0
      %547 = vmatmul.mubr.f32.gmra.mrb[0].mxu0 %v407
      %v548 = vpop.f32.mrb[0].mxu0
      %v549 = vadd.f32 %v361, %v548
      %v550 = vpop.f32.mrb[0].mxu0
      %551 = vmatprep.mubr.f32.mxu0 0.0
      %552 = vmatmul.mubr.f32.gmra.mrb[0].mxu0 %v410
      %v553 = vpop.f32.mrb[0].mxu0
      %v554 = vadd.f32 %v361, %v553
      %v555 = vpop.f32.mrb[0].mxu0
      %556 = vdwg.mxu0
      %v557 = vxor.u32 %v479, 2147483648
      %v558 = vxor.u32 %v484, 2147483648
      %v559 = vxor.u32 %v489, 2147483648
      %v560 = vxor.u32 %v494, 2147483648
      %v561 = vxor.u32 %v499, 2147483648
      %v562 = vxor.u32 %v504, 2147483648
      %v563 = vxor.u32 %v509, 2147483648
      %v564 = vxor.u32 %v514, 2147483648
      %v565 = vxor.u32 %v519, 2147483648
      %v566 = vxor.u32 %v524, 2147483648
      %v567 = vxor.u32 %v529, 2147483648
      %v568 = vxor.u32 %v534, 2147483648
      %v569 = vxor.u32 %v539, 2147483648
      %v570 = vxor.u32 %v544, 2147483648
      %v571 = vxor.u32 %v549, 2147483648
      %v572 = vxor.u32 %v554, 2147483648
      %v573 = vmul.f32 %v557, 1.442695
      %v574 = vpow.pop %v573
      %v575 = vmul.f32 %v558, 1.442695
      %v576 = vpow.pop %v575
      %v577 = vmul.f32 %v559, 1.442695
      %v578 = vpow.pop %v577
      %v579 = vmul.f32 %v560, 1.442695
      %v580 = vpow.pop %v579
      %v581 = vmul.f32 %v561, 1.442695
      %v582 = vpow.pop %v581
      %v583 = vmul.f32 %v562, 1.442695
      %v584 = vpow.pop %v583
      %v585 = vmul.f32 %v563, 1.442695
      %v586 = vpow.pop %v585
      %v587 = vmul.f32 %v564, 1.442695
      %v588 = vpow.pop %v587
      %v589 = vmul.f32 %v565, 1.442695
      %v590 = vpow.pop %v589
      %v591 = vmul.f32 %v566, 1.442695
      %v592 = vpow.pop %v591
      %v593 = vmul.f32 %v567, 1.442695
      %v594 = vpow.pop %v593
      %v595 = vmul.f32 %v568, 1.442695
      %v596 = vpow.pop %v595
      %v597 = vmul.f32 %v569, 1.442695
      %v598 = vpow.pop %v597
      %v599 = vmul.f32 %v570, 1.442695
      %v600 = vpow.pop %v599
      %v601 = vmul.f32 %v571, 1.442695
      %v602 = vpow.pop %v601
      %v603 = vmul.f32 %v572, 1.442695
      %v604 = vpow.pop %v603
      %v605 = vadd.f32 %v574, 1.0
      %v606 = vadd.f32 %v576, 1.0
      %v607 = vadd.f32 %v578, 1.0
      %v608 = vadd.f32 %v580, 1.0
      %v609 = vadd.f32 %v582, 1.0
      %v610 = vadd.f32 %v584, 1.0
      %v611 = vadd.f32 %v586, 1.0
      %v612 = vadd.f32 %v588, 1.0
      %v613 = vadd.f32 %v590, 1.0
      %v614 = vadd.f32 %v592, 1.0
      %v615 = vadd.f32 %v594, 1.0
      %v616 = vadd.f32 %v596, 1.0
      %v617 = vadd.f32 %v598, 1.0
      %v618 = vadd.f32 %v600, 1.0
      %v619 = vadd.f32 %v602, 1.0
      %v620 = vadd.f32 %v604, 1.0
      %v621 = vrcp.pop %v605
      %v622 = vmul.f32 1.0, %v621
      %v623 = vrcp.pop %v606
      %v624 = vmul.f32 1.0, %v623
      %v625 = vrcp.pop %v607
      %v626 = vmul.f32 1.0, %v625
      %v627 = vrcp.pop %v608
      %v628 = vmul.f32 1.0, %v627
      %v629 = vrcp.pop %v609
      %v630 = vmul.f32 1.0, %v629
      %v631 = vrcp.pop %v610
      %v632 = vmul.f32 1.0, %v631
      %v633 = vrcp.pop %v611
      %v634 = vmul.f32 1.0, %v633
      %v635 = vrcp.pop %v612
      %v636 = vmul.f32 1.0, %v635
      %v637 = vrcp.pop %v613
      %v638 = vmul.f32 1.0, %v637
      %v639 = vrcp.pop %v614
      %v640 = vmul.f32 1.0, %v639
      %v641 = vrcp.pop %v615
      %v642 = vmul.f32 1.0, %v641
      %v643 = vrcp.pop %v616
      %v644 = vmul.f32 1.0, %v643
      %v645 = vrcp.pop %v617
      %v646 = vmul.f32 1.0, %v645
      %v647 = vrcp.pop %v618
      %v648 = vmul.f32 1.0, %v647
      %v649 = vrcp.pop %v619
      %v650 = vmul.f32 1.0, %v649
      %v651 = vrcp.pop %v620
      %v652 = vmul.f32 1.0, %v651
      %v653 = vld [vmem:[%s3] sm:$0xff]
      %v654 = vld [vmem:[%s3 + $0x8] sm:$0xff]
      %v655 = vld [vmem:[%s3 + $0x10] sm:$0xff]
      %v656 = vld [vmem:[%s3 + $0x18] sm:$0xff]
      %v657 = vld [vmem:[%s3 + $0x20] sm:$0xff]
      %v658 = vld [vmem:[%s3 + $0x28] sm:$0xff]
      %v659 = vld [vmem:[%s3 + $0x30] sm:$0xff]
      %v660 = vld [vmem:[%s3 + $0x38] sm:$0xff]
      %v661 = vld [vmem:[%s4] sm:$0x1]
      %v663 = vlaneseq
      %v664 = vshrl.u32 %v663, 7
      %v665 = vsub.s32 0, %v664
      %v666 = vrot.slane %v661, %v665
      %vm668 = vcmask 523264
      %v670 = vsel %vm668, %v622, 0
      %v673 = vsel %vm668, %v624, 0
      %v676 = vsel %vm668, %v626, 0
      %v679 = vsel %vm668, %v628, 0
      %v682 = vsel %vm668, %v630, 0
      %v685 = vsel %vm668, %v632, 0
      %v688 = vsel %vm668, %v634, 0
      %v691 = vsel %vm668, %v636, 0
      %v694 = vsel %vm668, %v638, 0
      %v697 = vsel %vm668, %v640, 0
      %v700 = vsel %vm668, %v642, 0
      %v703 = vsel %vm668, %v644, 0
      %v706 = vsel %vm668, %v646, 0
      %v709 = vsel %vm668, %v648, 0
      %v712 = vsel %vm668, %v650, 0
      %v715 = vsel %vm668, %v652, 0
      %717 = vmatprep.subr.mxu0 0.0
      %718 = vmatpush1.msra.mxu0 %v653
      %719 = vmatprep.subr.mxu0 0.0
      %720 = vmatpush1.msra.mxu0 %v654
      %721 = vmatprep.subr.mxu0 0.0
      %722 = vmatpush1.msra.mxu0 %v655
      %723 = vmatprep.subr.mxu0 0.0
      %724 = vmatpush1.msra.mxu0 %v656
      %725 = vmatprep.subr.mxu0 0.0
      %726 = vmatpush1.msra.mxu0 %v657
      %727 = vmatprep.subr.mxu0 0.0
      %728 = vmatpush1.msra.mxu0 %v658
      %729 = vmatprep.subr.mxu0 0.0
      %730 = vmatpush1.msra.mxu0 %v659
      %731 = vmatprep.subr.mxu0 0.0
      %732 = vmatpush1.msra.mxu0 %v660
      %733 = vmatprep.subr.mxu0 0.0
      %734 = vmatpush1.msra.mxu0 0.0
      %735 = vmatprep.subr.mxu0 0.0
      %736 = vmatpush1.msra.mxu0 0.0
      %737 = vmatprep.subr.mxu0 0.0
      %738 = vmatpush1.msra.mxu0 0.0
      %739 = vmatprep.subr.mxu0 0.0
      %740 = vmatpush1.msra.mxu0 0.0
      %741 = vmatprep.subr.mxu0 0.0
      %742 = vmatpush1.msra.mxu0 0.0
      %743 = vmatprep.subr.mxu0 0.0
      %744 = vmatpush1.msra.mxu0 0.0
      %745 = vmatprep.subr.mxu0 0.0
      %746 = vmatpush1.msra.mxu0 0.0
      %747 = vmatprep.subr.mxu0 0.0
      %748 = vmatpush1.msra.mxu0 0.0
      %749 = vmatprep.subr.mxu0 0.0
      %750 = vmatpush1.msra.mxu0 0.0
      %751 = vmatprep.subr.mxu0 0.0
      %752 = vmatpush1.msra.mxu0 0.0
      %753 = vmatprep.subr.mxu0 0.0
      %754 = vmatpush1.msra.mxu0 0.0
      %755 = vmatprep.subr.mxu0 0.0
      %756 = vmatpush1.msra.mxu0 0.0
      %757 = vmatprep.subr.mxu0 0.0
      %758 = vmatpush1.msra.mxu0 0.0
      %759 = vmatprep.subr.mxu0 0.0
      %760 = vmatpush1.msra.mxu0 0.0
      %761 = vmatprep.subr.mxu0 0.0
      %762 = vmatpush1.msra.mxu0 0.0
      %763 = vmatprep.subr.mxu0 0.0
      %764 = vmatpush1.msra.mxu0 0.0
      %765 = vmatprep.subr.mxu0 0.0
      %766 = vmatpush1.msra.mxu0 0.0
      %767 = vmatprep.subr.mxu0 0.0
      %768 = vmatpush1.msra.mxu0 0.0
      %769 = vmatprep.subr.mxu0 0.0
      %770 = vmatpush1.msra.mxu0 0.0
      %771 = vmatprep.subr.mxu0 0.0
      %772 = vmatpush1.msra.mxu0 0.0
      %773 = vmatprep.subr.mxu0 0.0
      %774 = vmatpush1.msra.mxu0 0.0
      %775 = vmatprep.subr.mxu0 0.0
      %776 = vmatpush1.msra.mxu0 0.0
      %777 = vmatprep.subr.mxu0 0.0
      %778 = vmatpush1.msra.mxu0 0.0
      %779 = vmatprep.subr.mxu0 0.0
      %780 = vmatpush1.msra.mxu0 0.0
      %781 = vmatprep.mubr.f32.mxu0 0.0
      %782 = vmatmul.mubr.f32.gmra.mrb[0].mxu0 %v670
      %v783 = vpop.f32.mrb[0].mxu0
      %v784 = vadd.f32 %v666, %v783
      %v785 = vpop.f32.mrb[0].mxu0
      %786 = vmatprep.mubr.f32.mxu0 0.0
      %787 = vmatmul.mubr.f32.gmra.mrb[0].mxu0 %v673
      %v788 = vpop.f32.mrb[0].mxu0
      %v789 = vadd.f32 %v666, %v788
      %v790 = vpop.f32.mrb[0].mxu0
      %791 = vmatprep.mubr.f32.mxu0 0.0
      %792 = vmatmul.mubr.f32.gmra.mrb[0].mxu0 %v676
      %v793 = vpop.f32.mrb[0].mxu0
      %v794 = vadd.f32 %v666, %v793
      %v795 = vpop.f32.mrb[0].mxu0
      %796 = vmatprep.mubr.f32.mxu0 0.0
      %797 = vmatmul.mubr.f32.gmra.mrb[0].mxu0 %v679
      %v798 = vpop.f32.mrb[0].mxu0
      %v799 = vadd.f32 %v666, %v798
      %v800 = vpop.f32.mrb[0].mxu0
      %801 = vmatprep.mubr.f32.mxu0 0.0
      %802 = vmatmul.mubr.f32.gmra.mrb[0].mxu0 %v682
      %v803 = vpop.f32.mrb[0].mxu0
      %v804 = vadd.f32 %v666, %v803
      %v805 = vpop.f32.mrb[0].mxu0
      %806 = vmatprep.mubr.f32.mxu0 0.0
      %807 = vmatmul.mubr.f32.gmra.mrb[0].mxu0 %v685
      %v808 = vpop.f32.mrb[0].mxu0
      %v809 = vadd.f32 %v666, %v808
      %v810 = vpop.f32.mrb[0].mxu0
      %811 = vmatprep.mubr.f32.mxu0 0.0
      %812 = vmatmul.mubr.f32.gmra.mrb[0].mxu0 %v688
      %v813 = vpop.f32.mrb[0].mxu0
      %v814 = vadd.f32 %v666, %v813
      %v815 = vpop.f32.mrb[0].mxu0
      %816 = vmatprep.mubr.f32.mxu0 0.0
      %817 = vmatmul.mubr.f32.gmra.mrb[0].mxu0 %v691
      %v818 = vpop.f32.mrb[0].mxu0
      %v819 = vadd.f32 %v666, %v818
      %v820 = vpop.f32.mrb[0].mxu0
      %821 = vmatprep.mubr.f32.mxu0 0.0
      %822 = vmatmul.mubr.f32.gmra.mrb[0].mxu0 %v694
      %v823 = vpop.f32.mrb[0].mxu0
      %v824 = vadd.f32 %v666, %v823
      %v825 = vpop.f32.mrb[0].mxu0
      %826 = vmatprep.mubr.f32.mxu0 0.0
      %827 = vmatmul.mubr.f32.gmra.mrb[0].mxu0 %v697
      %v828 = vpop.f32.mrb[0].mxu0
      %v829 = vadd.f32 %v666, %v828
      %v830 = vpop.f32.mrb[0].mxu0
      %831 = vmatprep.mubr.f32.mxu0 0.0
      %832 = vmatmul.mubr.f32.gmra.mrb[0].mxu0 %v700
      %v833 = vpop.f32.mrb[0].mxu0
      %v834 = vadd.f32 %v666, %v833
      %v835 = vpop.f32.mrb[0].mxu0
      %836 = vmatprep.mubr.f32.mxu0 0.0
      %837 = vmatmul.mubr.f32.gmra.mrb[0].mxu0 %v703
      %v838 = vpop.f32.mrb[0].mxu0
      %v839 = vadd.f32 %v666, %v838
      %v840 = vpop.f32.mrb[0].mxu0
      %841 = vmatprep.mubr.f32.mxu0 0.0
      %842 = vmatmul.mubr.f32.gmra.mrb[0].mxu0 %v706
      %v843 = vpop.f32.mrb[0].mxu0
      %v844 = vadd.f32 %v666, %v843
      %v845 = vpop.f32.mrb[0].mxu0
      %846 = vmatprep.mubr.f32.mxu0 0.0
      %847 = vmatmul.mubr.f32.gmra.mrb[0].mxu0 %v709
      %v848 = vpop.f32.mrb[0].mxu0
      %v849 = vadd.f32 %v666, %v848
      %v850 = vpop.f32.mrb[0].mxu0
      %851 = vmatprep.mubr.f32.mxu0 0.0
      %852 = vmatmul.mubr.f32.gmra.mrb[0].mxu0 %v712
      %v853 = vpop.f32.mrb[0].mxu0
      %v854 = vadd.f32 %v666, %v853
      %v855 = vpop.f32.mrb[0].mxu0
      %856 = vmatprep.mubr.f32.mxu0 0.0
      %857 = vmatmul.mubr.f32.gmra.mrb[0].mxu0 %v715
      %v858 = vpop.f32.mrb[0].mxu0
      %v859 = vadd.f32 %v666, %v858
      %v860 = vpop.f32.mrb[0].mxu0
      %861 = vdwg.mxu0
      %v862 = vxor.u32 %v784, 2147483648
      %v863 = vxor.u32 %v789, 2147483648
      %v864 = vxor.u32 %v794, 2147483648
      %v865 = vxor.u32 %v799, 2147483648
      %v866 = vxor.u32 %v804, 2147483648
      %v867 = vxor.u32 %v809, 2147483648
      %v868 = vxor.u32 %v814, 2147483648
      %v869 = vxor.u32 %v819, 2147483648
      %v870 = vxor.u32 %v824, 2147483648
      %v871 = vxor.u32 %v829, 2147483648
      %v872 = vxor.u32 %v834, 2147483648
      %v873 = vxor.u32 %v839, 2147483648
      %v874 = vxor.u32 %v844, 2147483648
      %v875 = vxor.u32 %v849, 2147483648
      %v876 = vxor.u32 %v854, 2147483648
      %v877 = vxor.u32 %v859, 2147483648
      %v878 = vmul.f32 %v862, 1.442695
      %v879 = vpow.pop %v878
      %v880 = vmul.f32 %v863, 1.442695
      %v881 = vpow.pop %v880
      %v882 = vmul.f32 %v864, 1.442695
      %v883 = vpow.pop %v882
      %v884 = vmul.f32 %v865, 1.442695
      %v885 = vpow.pop %v884
      %v886 = vmul.f32 %v866, 1.442695
      %v887 = vpow.pop %v886
      %v888 = vmul.f32 %v867, 1.442695
      %v889 = vpow.pop %v888
      %v890 = vmul.f32 %v868, 1.442695
      %v891 = vpow.pop %v890
      %v892 = vmul.f32 %v869, 1.442695
      %v893 = vpow.pop %v892
      %v894 = vmul.f32 %v870, 1.442695
      %v895 = vpow.pop %v894
      %v896 = vmul.f32 %v871, 1.442695
      %v897 = vpow.pop %v896
      %v898 = vmul.f32 %v872, 1.442695
      %v899 = vpow.pop %v898
      %v900 = vmul.f32 %v873, 1.442695
      %v901 = vpow.pop %v900
      %v902 = vmul.f32 %v874, 1.442695
      %v903 = vpow.pop %v902
      %v904 = vmul.f32 %v875, 1.442695
      %v905 = vpow.pop %v904
      %v906 = vmul.f32 %v876, 1.442695
      %v907 = vpow.pop %v906
      %v908 = vmul.f32 %v877, 1.442695
      %v909 = vpow.pop %v908
      %v910 = vadd.f32 %v879, 1.0
      %v911 = vadd.f32 %v881, 1.0
      %v912 = vadd.f32 %v883, 1.0
      %v913 = vadd.f32 %v885, 1.0
      %v914 = vadd.f32 %v887, 1.0
      %v915 = vadd.f32 %v889, 1.0
      %v916 = vadd.f32 %v891, 1.0
      %v917 = vadd.f32 %v893, 1.0
      %v918 = vadd.f32 %v895, 1.0
      %v919 = vadd.f32 %v897, 1.0
      %v920 = vadd.f32 %v899, 1.0
      %v921 = vadd.f32 %v901, 1.0
      %v922 = vadd.f32 %v903, 1.0
      %v923 = vadd.f32 %v905, 1.0
      %v924 = vadd.f32 %v907, 1.0
      %v925 = vadd.f32 %v909, 1.0
      %v926 = vrcp.pop %v910
      %v927 = vmul.f32 1.0, %v926
      %v928 = vrcp.pop %v911
      %v929 = vmul.f32 1.0, %v928
      %v930 = vrcp.pop %v912
      %v931 = vmul.f32 1.0, %v930
      %v932 = vrcp.pop %v913
      %v933 = vmul.f32 1.0, %v932
      %v934 = vrcp.pop %v914
      %v935 = vmul.f32 1.0, %v934
      %v936 = vrcp.pop %v915
      %v937 = vmul.f32 1.0, %v936
      %v938 = vrcp.pop %v916
      %v939 = vmul.f32 1.0, %v938
      %v940 = vrcp.pop %v917
      %v941 = vmul.f32 1.0, %v940
      %v942 = vrcp.pop %v918
      %v943 = vmul.f32 1.0, %v942
      %v944 = vrcp.pop %v919
      %v945 = vmul.f32 1.0, %v944
      %v946 = vrcp.pop %v920
      %v947 = vmul.f32 1.0, %v946
      %v948 = vrcp.pop %v921
      %v949 = vmul.f32 1.0, %v948
      %v950 = vrcp.pop %v922
      %v951 = vmul.f32 1.0, %v950
      %v952 = vrcp.pop %v923
      %v953 = vmul.f32 1.0, %v952
      %v954 = vrcp.pop %v924
      %v955 = vmul.f32 1.0, %v954
      %v956 = vrcp.pop %v925
      %v957 = vmul.f32 1.0, %v956
      %v958 = vld [vmem:[%s5] sm:$0xff]
      %v959 = vld [vmem:[%s5 + $0x8] sm:$0xff]
      %v960 = vld [vmem:[%s5 + $0x10] sm:$0xff]
      %v961 = vld [vmem:[%s5 + $0x18] sm:$0xff]
      %v962 = vld [vmem:[%s5 + $0x20] sm:$0xff]
      %v963 = vld [vmem:[%s5 + $0x28] sm:$0xff]
      %v964 = vld [vmem:[%s5 + $0x30] sm:$0xff]
      %v965 = vld [vmem:[%s5 + $0x38] sm:$0xff]
      %v966 = vld [vmem:[%s6] sm:$0x1]
      %v968 = vlaneseq
      %v969 = vshrl.u32 %v968, 7
      %v970 = vsub.s32 0, %v969
      %v971 = vrot.slane %v966, %v970
      %v974 = vsel %vm668, %v927, 0
      %v977 = vsel %vm668, %v929, 0
      %v980 = vsel %vm668, %v931, 0
      %v983 = vsel %vm668, %v933, 0
      %v986 = vsel %vm668, %v935, 0
      %v989 = vsel %vm668, %v937, 0
      %v992 = vsel %vm668, %v939, 0
      %v995 = vsel %vm668, %v941, 0
      %v998 = vsel %vm668, %v943, 0
      %v1001 = vsel %vm668, %v945, 0
      %v1004 = vsel %vm668, %v947, 0
      %v1007 = vsel %vm668, %v949, 0
      %v1010 = vsel %vm668, %v951, 0
      %v1013 = vsel %vm668, %v953, 0
      %v1016 = vsel %vm668, %v955, 0
      %v1019 = vsel %vm668, %v957, 0
      %1021 = vmatprep.subr.mxu0 0.0
      %1022 = vmatpush1.msra.mxu0 %v958
      %1023 = vmatprep.subr.mxu0 0.0
      %1024 = vmatpush1.msra.mxu0 %v959
      %1025 = vmatprep.subr.mxu0 0.0
      %1026 = vmatpush1.msra.mxu0 %v960
      %1027 = vmatprep.subr.mxu0 0.0
      %1028 = vmatpush1.msra.mxu0 %v961
      %1029 = vmatprep.subr.mxu0 0.0
      %1030 = vmatpush1.msra.mxu0 %v962
      %1031 = vmatprep.subr.mxu0 0.0
      %1032 = vmatpush1.msra.mxu0 %v963
      %1033 = vmatprep.subr.mxu0 0.0
      %1034 = vmatpush1.msra.mxu0 %v964
      %1035 = vmatprep.subr.mxu0 0.0
      %1036 = vmatpush1.msra.mxu0 %v965
      %1037 = vmatprep.subr.mxu0 0.0
      %1038 = vmatpush1.msra.mxu0 0.0
      %1039 = vmatprep.subr.mxu0 0.0
      %1040 = vmatpush1.msra.mxu0 0.0
      %1041 = vmatprep.subr.mxu0 0.0
      %1042 = vmatpush1.msra.mxu0 0.0
      %1043 = vmatprep.subr.mxu0 0.0
      %1044 = vmatpush1.msra.mxu0 0.0
      %1045 = vmatprep.subr.mxu0 0.0
      %1046 = vmatpush1.msra.mxu0 0.0
      %1047 = vmatprep.subr.mxu0 0.0
      %1048 = vmatpush1.msra.mxu0 0.0
      %1049 = vmatprep.subr.mxu0 0.0
      %1050 = vmatpush1.msra.mxu0 0.0
      %1051 = vmatprep.subr.mxu0 0.0
      %1052 = vmatpush1.msra.mxu0 0.0
      %1053 = vmatprep.subr.mxu0 0.0
      %1054 = vmatpush1.msra.mxu0 0.0
      %1055 = vmatprep.subr.mxu0 0.0
      %1056 = vmatpush1.msra.mxu0 0.0
      %1057 = vmatprep.subr.mxu0 0.0
      %1058 = vmatpush1.msra.mxu0 0.0
      %1059 = vmatprep.subr.mxu0 0.0
      %1060 = vmatpush1.msra.mxu0 0.0
      %1061 = vmatprep.subr.mxu0 0.0
      %1062 = vmatpush1.msra.mxu0 0.0
      %1063 = vmatprep.subr.mxu0 0.0
      %1064 = vmatpush1.msra.mxu0 0.0
      %1065 = vmatprep.subr.mxu0 0.0
      %1066 = vmatpush1.msra.mxu0 0.0
      %1067 = vmatprep.subr.mxu0 0.0
      %1068 = vmatpush1.msra.mxu0 0.0
      %1069 = vmatprep.subr.mxu0 0.0
      %1070 = vmatpush1.msra.mxu0 0.0
      %1071 = vmatprep.subr.mxu0 0.0
      %1072 = vmatpush1.msra.mxu0 0.0
      %1073 = vmatprep.subr.mxu0 0.0
      %1074 = vmatpush1.msra.mxu0 0.0
      %1075 = vmatprep.subr.mxu0 0.0
      %1076 = vmatpush1.msra.mxu0 0.0
      %1077 = vmatprep.subr.mxu0 0.0
      %1078 = vmatpush1.msra.mxu0 0.0
      %1079 = vmatprep.subr.mxu0 0.0
      %1080 = vmatpush1.msra.mxu0 0.0
      %1081 = vmatprep.subr.mxu0 0.0
      %1082 = vmatpush1.msra.mxu0 0.0
      %1083 = vmatprep.subr.mxu0 0.0
      %1084 = vmatpush1.msra.mxu0 0.0
      %1085 = vmatprep.mubr.f32.mxu0 0.0
      %1086 = vmatmul.mubr.f32.gmra.mrb[0].mxu0 %v974
      %v1087 = vpop.f32.mrb[0].mxu0
      %v1088 = vadd.f32 %v971, %v1087
      %v1089 = vpop.f32.mrb[0].mxu0
      %1090 = vmatprep.mubr.f32.mxu0 0.0
      %1091 = vmatmul.mubr.f32.gmra.mrb[0].mxu0 %v977
      %v1092 = vpop.f32.mrb[0].mxu0
      %v1093 = vadd.f32 %v971, %v1092
      %v1094 = vpop.f32.mrb[0].mxu0
      %1095 = vmatprep.mubr.f32.mxu0 0.0
      %1096 = vmatmul.mubr.f32.gmra.mrb[0].mxu0 %v980
      %v1097 = vpop.f32.mrb[0].mxu0
      %v1098 = vadd.f32 %v971, %v1097
      %v1099 = vpop.f32.mrb[0].mxu0
      %1100 = vmatprep.mubr.f32.mxu0 0.0
      %1101 = vmatmul.mubr.f32.gmra.mrb[0].mxu0 %v983
      %v1102 = vpop.f32.mrb[0].mxu0
      %v1103 = vadd.f32 %v971, %v1102
      %v1104 = vpop.f32.mrb[0].mxu0
      %1105 = vmatprep.mubr.f32.mxu0 0.0
      %1106 = vmatmul.mubr.f32.gmra.mrb[0].mxu0 %v986
      %v1107 = vpop.f32.mrb[0].mxu0
      %v1108 = vadd.f32 %v971, %v1107
      %v1109 = vpop.f32.mrb[0].mxu0
      %1110 = vmatprep.mubr.f32.mxu0 0.0
      %1111 = vmatmul.mubr.f32.gmra.mrb[0].mxu0 %v989
      %v1112 = vpop.f32.mrb[0].mxu0
      %v1113 = vadd.f32 %v971, %v1112
      %v1114 = vpop.f32.mrb[0].mxu0
      %1115 = vmatprep.mubr.f32.mxu0 0.0
      %1116 = vmatmul.mubr.f32.gmra.mrb[0].mxu0 %v992
      %v1117 = vpop.f32.mrb[0].mxu0
      %v1118 = vadd.f32 %v971, %v1117
      %v1119 = vpop.f32.mrb[0].mxu0
      %1120 = vmatprep.mubr.f32.mxu0 0.0
      %1121 = vmatmul.mubr.f32.gmra.mrb[0].mxu0 %v995
      %v1122 = vpop.f32.mrb[0].mxu0
      %v1123 = vadd.f32 %v971, %v1122
      %v1124 = vpop.f32.mrb[0].mxu0
      %1125 = vmatprep.mubr.f32.mxu0 0.0
      %1126 = vmatmul.mubr.f32.gmra.mrb[0].mxu0 %v998
      %v1127 = vpop.f32.mrb[0].mxu0
      %v1128 = vadd.f32 %v971, %v1127
      %v1129 = vpop.f32.mrb[0].mxu0
      %1130 = vmatprep.mubr.f32.mxu0 0.0
      %1131 = vmatmul.mubr.f32.gmra.mrb[0].mxu0 %v1001
      %v1132 = vpop.f32.mrb[0].mxu0
      %v1133 = vadd.f32 %v971, %v1132
      %v1134 = vpop.f32.mrb[0].mxu0
      %1135 = vmatprep.mubr.f32.mxu0 0.0
      %1136 = vmatmul.mubr.f32.gmra.mrb[0].mxu0 %v1004
      %v1137 = vpop.f32.mrb[0].mxu0
      %v1138 = vadd.f32 %v971, %v1137
      %v1139 = vpop.f32.mrb[0].mxu0
      %1140 = vmatprep.mubr.f32.mxu0 0.0
      %1141 = vmatmul.mubr.f32.gmra.mrb[0].mxu0 %v1007
      %v1142 = vpop.f32.mrb[0].mxu0
      %v1143 = vadd.f32 %v971, %v1142
      %v1144 = vpop.f32.mrb[0].mxu0
      %1145 = vmatprep.mubr.f32.mxu0 0.0
      %1146 = vmatmul.mubr.f32.gmra.mrb[0].mxu0 %v1010
      %v1147 = vpop.f32.mrb[0].mxu0
      %v1148 = vadd.f32 %v971, %v1147
      %v1149 = vpop.f32.mrb[0].mxu0
      %1150 = vmatprep.mubr.f32.mxu0 0.0
      %1151 = vmatmul.mubr.f32.gmra.mrb[0].mxu0 %v1013
      %v1152 = vpop.f32.mrb[0].mxu0
      %v1153 = vadd.f32 %v971, %v1152
      %v1154 = vpop.f32.mrb[0].mxu0
      %1155 = vmatprep.mubr.f32.mxu0 0.0
      %1156 = vmatmul.mubr.f32.gmra.mrb[0].mxu0 %v1016
      %v1157 = vpop.f32.mrb[0].mxu0
      %v1158 = vadd.f32 %v971, %v1157
      %v1159 = vpop.f32.mrb[0].mxu0
      %1160 = vmatprep.mubr.f32.mxu0 0.0
      %1161 = vmatmul.mubr.f32.gmra.mrb[0].mxu0 %v1019
      %v1162 = vpop.f32.mrb[0].mxu0
      %v1163 = vadd.f32 %v971, %v1162
      %v1164 = vpop.f32.mrb[0].mxu0
      %1165 = vdwg.mxu0
      %v1166 = vmax.f32 %v1088, 0.0
      %v1167 = vmax.f32 %v1093, 0.0
      %v1168 = vmax.f32 %v1098, 0.0
      %v1169 = vmax.f32 %v1103, 0.0
      %v1170 = vmax.f32 %v1108, 0.0
      %v1171 = vmax.f32 %v1113, 0.0
      %v1172 = vmax.f32 %v1118, 0.0
      %v1173 = vmax.f32 %v1123, 0.0
      %v1174 = vmax.f32 %v1128, 0.0
      %v1175 = vmax.f32 %v1133, 0.0
      %v1176 = vmax.f32 %v1138, 0.0
      %v1177 = vmax.f32 %v1143, 0.0
      %v1178 = vmax.f32 %v1148, 0.0
      %v1179 = vmax.f32 %v1153, 0.0
      %v1180 = vmax.f32 %v1158, 0.0
      %v1181 = vmax.f32 %v1163, 0.0
      %v1182 = vld [vmem:[%s7] sm:$0xff]
      %v1183 = vld [vmem:[%s7 + $0x8] sm:$0xff]
      %v1184 = vld [vmem:[%s7 + $0x10] sm:$0xff]
      %v1185 = vld [vmem:[%s7 + $0x18] sm:$0xff]
      %v1186 = vld [vmem:[%s8] sm:$0x1]
      %v1188 = vlaneseq
      %v1189 = vshrl.u32 %v1188, 7
      %v1190 = vsub.s32 0, %v1189
      %v1191 = vrot.slane %v1186, %v1190
      %v1194 = vsel %vm363, %v1166, 0
      %v1197 = vsel %vm363, %v1167, 0
      %v1200 = vsel %vm363, %v1168, 0
      %v1203 = vsel %vm363, %v1169, 0
      %v1206 = vsel %vm363, %v1170, 0
      %v1209 = vsel %vm363, %v1171, 0
      %v1212 = vsel %vm363, %v1172, 0
      %v1215 = vsel %vm363, %v1173, 0
      %v1218 = vsel %vm363, %v1174, 0
      %v1221 = vsel %vm363, %v1175, 0
      %v1224 = vsel %vm363, %v1176, 0
      %v1227 = vsel %vm363, %v1177, 0
      %v1230 = vsel %vm363, %v1178, 0
      %v1233 = vsel %vm363, %v1179, 0
      %v1236 = vsel %vm363, %v1180, 0
      %v1239 = vsel %vm363, %v1181, 0
      %1241 = vmatprep.subr.mxu0 0.0
      %1242 = vmatpush1.msra.mxu0 %v1182
      %1243 = vmatprep.subr.mxu0 0.0
      %1244 = vmatpush1.msra.mxu0 %v1183
      %1245 = vmatprep.subr.mxu0 0.0
      %1246 = vmatpush1.msra.mxu0 %v1184
      %1247 = vmatprep.subr.mxu0 0.0
      %1248 = vmatpush1.msra.mxu0 %v1185
      %1249 = vmatprep.subr.mxu0 0.0
      %1250 = vmatpush1.msra.mxu0 0.0
      %1251 = vmatprep.subr.mxu0 0.0
      %1252 = vmatpush1.msra.mxu0 0.0
      %1253 = vmatprep.subr.mxu0 0.0
      %1254 = vmatpush1.msra.mxu0 0.0
      %1255 = vmatprep.subr.mxu0 0.0
      %1256 = vmatpush1.msra.mxu0 0.0
      %1257 = vmatprep.subr.mxu0 0.0
      %1258 = vmatpush1.msra.mxu0 0.0
      %1259 = vmatprep.subr.mxu0 0.0
      %1260 = vmatpush1.msra.mxu0 0.0
      %1261 = vmatprep.subr.mxu0 0.0
      %1262 = vmatpush1.msra.mxu0 0.0
      %1263 = vmatprep.subr.mxu0 0.0
      %1264 = vmatpush1.msra.mxu0 0.0
      %1265 = vmatprep.subr.mxu0 0.0
      %1266 = vmatpush1.msra.mxu0 0.0
      %1267 = vmatprep.subr.mxu0 0.0
      %1268 = vmatpush1.msra.mxu0 0.0
      %1269 = vmatprep.subr.mxu0 0.0
      %1270 = vmatpush1.msra.mxu0 0.0
      %1271 = vmatprep.subr.mxu0 0.0
      %1272 = vmatpush1.msra.mxu0 0.0
      %1273 = vmatprep.subr.mxu0 0.0
      %1274 = vmatpush1.msra.mxu0 0.0
      %1275 = vmatprep.subr.mxu0 0.0
      %1276 = vmatpush1.msra.mxu0 0.0
      %1277 = vmatprep.subr.mxu0 0.0
      %1278 = vmatpush1.msra.mxu0 0.0
      %1279 = vmatprep.subr.mxu0 0.0
      %1280 = vmatpush1.msra.mxu0 0.0
      %1281 = vmatprep.subr.mxu0 0.0
      %1282 = vmatpush1.msra.mxu0 0.0
      %1283 = vmatprep.subr.mxu0 0.0
      %1284 = vmatpush1.msra.mxu0 0.0
      %1285 = vmatprep.subr.mxu0 0.0
      %1286 = vmatpush1.msra.mxu0 0.0
      %1287 = vmatprep.subr.mxu0 0.0
      %1288 = vmatpush1.msra.mxu0 0.0
      %1289 = vmatprep.subr.mxu0 0.0
      %1290 = vmatpush1.msra.mxu0 0.0
      %1291 = vmatprep.subr.mxu0 0.0
      %1292 = vmatpush1.msra.mxu0 0.0
      %1293 = vmatprep.subr.mxu0 0.0
      %1294 = vmatpush1.msra.mxu0 0.0
      %1295 = vmatprep.subr.mxu0 0.0
      %1296 = vmatpush1.msra.mxu0 0.0
      %1297 = vmatprep.subr.mxu0 0.0
      %1298 = vmatpush1.msra.mxu0 0.0
      %1299 = vmatprep.subr.mxu0 0.0
      %1300 = vmatpush1.msra.mxu0 0.0
      %1301 = vmatprep.subr.mxu0 0.0
      %1302 = vmatpush1.msra.mxu0 0.0
      %1303 = vmatprep.subr.mxu0 0.0
      %1304 = vmatpush1.msra.mxu0 0.0
      %1305 = vmatprep.mubr.f32.mxu0 0.0
      %1306 = vmatmul.mubr.f32.gmra.mrb[0].mxu0 %v1194
      %v1307 = vpop.f32.mrb[0].mxu0
      %v1308 = vadd.f32 %v1191, %v1307
      %v1309 = vpop.f32.mrb[0].mxu0
      %1310 = vmatprep.mubr.f32.mxu0 0.0
      %1311 = vmatmul.mubr.f32.gmra.mrb[0].mxu0 %v1197
      %v1312 = vpop.f32.mrb[0].mxu0
      %v1313 = vadd.f32 %v1191, %v1312
      %v1314 = vpop.f32.mrb[0].mxu0
      %1315 = vmatprep.mubr.f32.mxu0 0.0
      %1316 = vmatmul.mubr.f32.gmra.mrb[0].mxu0 %v1200
      %v1317 = vpop.f32.mrb[0].mxu0
      %v1318 = vadd.f32 %v1191, %v1317
      %v1319 = vpop.f32.mrb[0].mxu0
      %1320 = vmatprep.mubr.f32.mxu0 0.0
      %1321 = vmatmul.mubr.f32.gmra.mrb[0].mxu0 %v1203
      %v1322 = vpop.f32.mrb[0].mxu0
      %v1323 = vadd.f32 %v1191, %v1322
      %v1324 = vpop.f32.mrb[0].mxu0
      %1325 = vmatprep.mubr.f32.mxu0 0.0
      %1326 = vmatmul.mubr.f32.gmra.mrb[0].mxu0 %v1206
      %v1327 = vpop.f32.mrb[0].mxu0
      %v1328 = vadd.f32 %v1191, %v1327
      %v1329 = vpop.f32.mrb[0].mxu0
      %1330 = vmatprep.mubr.f32.mxu0 0.0
      %1331 = vmatmul.mubr.f32.gmra.mrb[0].mxu0 %v1209
      %v1332 = vpop.f32.mrb[0].mxu0
      %v1333 = vadd.f32 %v1191, %v1332
      %v1334 = vpop.f32.mrb[0].mxu0
      %1335 = vmatprep.mubr.f32.mxu0 0.0
      %1336 = vmatmul.mubr.f32.gmra.mrb[0].mxu0 %v1212
      %v1337 = vpop.f32.mrb[0].mxu0
      %v1338 = vadd.f32 %v1191, %v1337
      %v1339 = vpop.f32.mrb[0].mxu0
      %1340 = vmatprep.mubr.f32.mxu0 0.0
      %1341 = vmatmul.mubr.f32.gmra.mrb[0].mxu0 %v1215
      %v1342 = vpop.f32.mrb[0].mxu0
      %v1343 = vadd.f32 %v1191, %v1342
      %v1344 = vpop.f32.mrb[0].mxu0
      %1345 = vmatprep.mubr.f32.mxu0 0.0
      %1346 = vmatmul.mubr.f32.gmra.mrb[0].mxu0 %v1218
      %v1347 = vpop.f32.mrb[0].mxu0
      %v1348 = vadd.f32 %v1191, %v1347
      %v1349 = vpop.f32.mrb[0].mxu0
      %1350 = vmatprep.mubr.f32.mxu0 0.0
      %1351 = vmatmul.mubr.f32.gmra.mrb[0].mxu0 %v1221
      %v1352 = vpop.f32.mrb[0].mxu0
      %v1353 = vadd.f32 %v1191, %v1352
      %v1354 = vpop.f32.mrb[0].mxu0
      %1355 = vmatprep.mubr.f32.mxu0 0.0
      %1356 = vmatmul.mubr.f32.gmra.mrb[0].mxu0 %v1224
      %v1357 = vpop.f32.mrb[0].mxu0
      %v1358 = vadd.f32 %v1191, %v1357
      %v1359 = vpop.f32.mrb[0].mxu0
      %1360 = vmatprep.mubr.f32.mxu0 0.0
      %1361 = vmatmul.mubr.f32.gmra.mrb[0].mxu0 %v1227
      %v1362 = vpop.f32.mrb[0].mxu0
      %v1363 = vadd.f32 %v1191, %v1362
      %v1364 = vpop.f32.mrb[0].mxu0
      %1365 = vmatprep.mubr.f32.mxu0 0.0
      %1366 = vmatmul.mubr.f32.gmra.mrb[0].mxu0 %v1230
      %v1367 = vpop.f32.mrb[0].mxu0
      %v1368 = vadd.f32 %v1191, %v1367
      %v1369 = vpop.f32.mrb[0].mxu0
      %1370 = vmatprep.mubr.f32.mxu0 0.0
      %1371 = vmatmul.mubr.f32.gmra.mrb[0].mxu0 %v1233
      %v1372 = vpop.f32.mrb[0].mxu0
      %v1373 = vadd.f32 %v1191, %v1372
      %v1374 = vpop.f32.mrb[0].mxu0
      %1375 = vmatprep.mubr.f32.mxu0 0.0
      %1376 = vmatmul.mubr.f32.gmra.mrb[0].mxu0 %v1236
      %v1377 = vpop.f32.mrb[0].mxu0
      %v1378 = vadd.f32 %v1191, %v1377
      %v1379 = vpop.f32.mrb[0].mxu0
      %1380 = vmatprep.mubr.f32.mxu0 0.0
      %1381 = vmatmul.mubr.f32.gmra.mrb[0].mxu0 %v1239
      %v1382 = vpop.f32.mrb[0].mxu0
      %v1383 = vadd.f32 %v1191, %v1382
      %v1384 = vpop.f32.mrb[0].mxu0
      %1385 = vdwg.mxu0
      %vm1386 = vcmask 130048
      %1387 = vst.msk [vmem:[%s334] sm:$0xff] %vm1386, %v1308
      %1388 = vst.msk [vmem:[%s334 + $0x8] sm:$0xff] %vm1386, %v1313
      %1389 = vst.msk [vmem:[%s334 + $0x10] sm:$0xff] %vm1386, %v1318
      %1390 = vst.msk [vmem:[%s334 + $0x18] sm:$0xff] %vm1386, %v1323
      %1391 = vst.msk [vmem:[%s334 + $0x20] sm:$0xff] %vm1386, %v1328
      %1392 = vst.msk [vmem:[%s334 + $0x28] sm:$0xff] %vm1386, %v1333
      %1393 = vst.msk [vmem:[%s334 + $0x30] sm:$0xff] %vm1386, %v1338
      %1394 = vst.msk [vmem:[%s334 + $0x38] sm:$0xff] %vm1386, %v1343
      %1395 = vst.msk [vmem:[%s334 + $0x40] sm:$0xff] %vm1386, %v1348
      %1396 = vst.msk [vmem:[%s334 + $0x48] sm:$0xff] %vm1386, %v1353
      %1397 = vst.msk [vmem:[%s334 + $0x50] sm:$0xff] %vm1386, %v1358
      %1398 = vst.msk [vmem:[%s334 + $0x58] sm:$0xff] %vm1386, %v1363
      %1399 = vst.msk [vmem:[%s334 + $0x60] sm:$0xff] %vm1386, %v1368
      %1400 = vst.msk [vmem:[%s334 + $0x68] sm:$0xff] %vm1386, %v1373
      %1401 = vst.msk [vmem:[%s334 + $0x70] sm:$0xff] %vm1386, %v1378
      %1402 = vst.msk [vmem:[%s334 + $0x78] sm:$0xff] %vm1386, %v1383
      %s1403 = smul.u32 16, %s20
      %p1404 = scmp.lt.s32.totalorder %s1403, 31
      %s1405 = scalar_select %p1404, %s1403, 31
      %s1406 = smul.addr %s1405, 8
      %s1407 = scalar_lea.vmem %s9, %s1406
      // Predicated region
      $region57: #{tpu_custom_call.1} parent=55 // pred_check
        %p1408 = pneg %p232
      $region58: #{tpu_custom_call.1} parent=55 // pred_check_branch
        %1410 = sbr.rel (%p1408) target = $region60
      $region59: #{tpu_custom_call.1} parent=55 // pred_region
        %s1411 = smul.u32 16, %s20
      $region60: #{tpu_custom_call.1} parent=55 // pred_fallthru
        _
    $region56: #{tpu_custom_call.1} parent=5 // pred_fallthru
      _
    %p1412 = scmp.le.s32.totalorder 2, %s15
    // Predicated region
    $region61: #{tpu_custom_call.1} parent=5 // pred_check
      %p1413 = pneg %p1412
    $region62: #{tpu_custom_call.1} parent=5 // pred_check_branch
      %1415 = sbr.rel (%p1413) target = $region64
    $region63: #{tpu_custom_call.1} parent=5 // pred_region
      %s1416 = ssub.s32 %s15, 2
      // Predicated region
      $region65: #{tpu_custom_call.1} parent=63 // pred_check
        %p1417 = pneg %p238
      $region66: #{tpu_custom_call.1} parent=63 // pred_check_branch
        %1419 = sbr.rel (%p1417) target = $region68
      $region67: #{tpu_custom_call.1} parent=63 // pred_region
        %s1420 = smul.u32 16, %s21
        %p1421 = scmp.lt.s32.totalorder %s1420, 31
        %s1422 = scalar_select %p1421, %s1420, 31
        %s1423 = smul.addr %s1422, 8
        %s1424 = scalar_lea.vmem %s9, %s1423
      $region68: #{tpu_custom_call.1} parent=63 // pred_fallthru
        _
    $region64: #{tpu_custom_call.1} parent=5 // pred_fallthru
      _
  $region6: #{tpu_custom_call.1} parent=0 // loop_footer
    %s19 = sadd.s32 1, %s15
  $region7: #{tpu_custom_call.1} parent=0 // loop_footer_branch
    %14 = sbr.rel target = $region3
  $region8: #{tpu_custom_call.1} parent=0 // loop_exit
    _

</llo_original>
